<compile_context>
chip_gen: v7x
topology: tpu7x:2x2x1
jax: 0.10.0
libtpu: 0.0.40
codegen_flags: <defaults>
</compile_context>

<pallas_src>
import functools

import jax
import jax.numpy as jnp
from jax.experimental import pallas as pl
from jax.experimental.pallas import tpu as pltpu

F_IN = 32      # n_features
H1 = 128
H2 = 64
_LANES = 128
_LN2 = 0.6931471805599453


def _ssp(x):
    # shifted softplus, numerically stable: 2 EUP ops (exp, log1p) per element.
    return jnp.maximum(x, 0.0) + jnp.log1p(jnp.exp(-jnp.abs(x))) - _LN2


def _round_up(x, m):
    return ((x + m - 1) // m) * m


def _pair_property_kernel(x_ref, w1_ref, b1_ref, w2_ref, b2_ref, w3_ref,
                          o_ref, *, lane_blocks, mxu_dtype):
    # x_ref: (tm, F) row tile; weights/biases are resident (constant index_map).
    x = x_ref[...].astype(mxu_dtype)
    h = jnp.dot(x, w1_ref[...], preferred_element_type=jnp.float32)      # (tm, 128)
    h = _ssp(h + b1_ref[...])                                            # f32
    h = jnp.dot(h.astype(mxu_dtype), w2_ref[...],
                preferred_element_type=jnp.float32)                      # (tm, 64)
    h = _ssp(h + b2_ref[...])                                            # f32

    # Final 64 -> 1 layer as a VPU multiply + lane reduction (frees the MXU),
    # with rows folded (tm,) -> (tm//128, 128) so the output store is a dense,
    # unmasked full-tile write instead of a (TM, 1) masked partial store.
    h3 = h.reshape(lane_blocks, _LANES, h.shape[-1])      # leading-dim split only
    o = jnp.sum(h3 * w3_ref[...], axis=-1)                # (lane_blocks, 128)
    o_ref[...] = o.astype(o_ref.dtype)


def pair_property(msij, params, *, tile_rows=1024, mxu_dtype=jnp.float32):
    """msij: (B, A, NBR, F) -> (B, A, NBR, 1) float32.

    tile_rows: row tile size (multiple of 128).  1024 is a good default on
      v5e/v6e/v7x; lower it if you need >= 2 grid steps per TensorCore on v7x.
    mxu_dtype: jnp.float32 (v5e / tight numerics) or jnp.bfloat16 (v6e/v7x MXU
      fast path; accumulation and ssp remain f32).
    """
    w1, b1, w2, b2, w3, b3 = params
    B, A, NBR, F = msij.shape
    assert w1.shape == (F, H1) and w2.shape == (H1, H2) and w3.shape[0] == H2
    M = B * A * NBR
    x = msij.reshape(M, F)

    # Row tile: as large as practical, multiple of 128 so the output folds into
    # dense (tm//128, 128) blocks.  No wrapper-side padding of x.
    tm = min(_round_up(tile_rows, _LANES), _round_up(M, _LANES))
    lane_blocks = tm // _LANES
    num_tiles = pl.cdiv(M, tm)          # ragged last block handled by Pallas

    # Tiny per-call weight prep (cast / reshape of O(10KB) params).
    w1c = w1.astype(mxu_dtype)
    w2c = w2.astype(mxu_dtype)
    b1r = jnp.reshape(b1, (1, H1)).astype(jnp.float32)
    b2r = jnp.reshape(b2, (1, H2)).astype(jnp.float32)
    w3r = jnp.reshape(w3, (1, H2)).astype(jnp.float32)

    kernel = functools.partial(_pair_property_kernel,
                               lane_blocks=lane_blocks, mxu_dtype=mxu_dtype)

    in_bytes = int(jnp.dtype(msij.dtype).itemsize)
    w_bytes = int(jnp.dtype(mxu_dtype).itemsize)
    cost = pl.CostEstimate(
        flops=2 * M * (F * H1 + H1 * H2 + H2),
        transcendentals=2 * M * (H1 + H2),
        bytes_accessed=(M * F * in_bytes + M * 4
                        + (F * H1 + H1 * H2) * w_bytes + (H1 + 2 * H2) * 4),
    )

    out = pl.pallas_call(
        kernel,
        out_shape=jax.ShapeDtypeStruct((num_tiles * lane_blocks, _LANES),
                                       jnp.float32),
        grid_spec=pltpu.PrefetchScalarGridSpec(
            num_scalar_prefetch=0,
            grid=(num_tiles,),
            in_specs=[
                pl.BlockSpec((tm, F), lambda i: (i, 0)),     # x row tile
                pl.BlockSpec((F, H1), lambda i: (0, 0)),     # w1 (resident)
                pl.BlockSpec((1, H1), lambda i: (0, 0)),     # b1
                pl.BlockSpec((H1, H2), lambda i: (0, 0)),    # w2 (resident)
                pl.BlockSpec((1, H2), lambda i: (0, 0)),     # b2
                pl.BlockSpec((1, H2), lambda i: (0, 0)),     # w3 as row vector
            ],
            out_specs=pl.BlockSpec((lane_blocks, _LANES), lambda i: (i, 0)),
        ),
        compiler_params=pltpu.CompilerParams(
            dimension_semantics=("parallel",)),
        cost_estimate=cost,
    )(x, w1c, b1r, w2c, b2r, w3r)

    # Final bias b3 added here (cheaper than shipping a (1,1) block, which
    # would pad to a full (8,128) VMEM tile and add an input stream).
    out = out.reshape(-1)[:M] + jnp.reshape(b3, ()).astype(jnp.float32)
    return out.reshape(B, A, NBR, 1)


def init_params(key):
    k1, k2, k3 = jax.random.split(key, 3)
    w1 = jax.random.normal(k1, (F_IN, H1), jnp.float32) / jnp.sqrt(F_IN)
    b1 = jnp.zeros((1, H1), jnp.float32)
    w2 = jax.random.normal(k2, (H1, H2), jnp.float32) / jnp.sqrt(H1)
    b2 = jnp.zeros((1, H2), jnp.float32)
    w3 = jax.random.normal(k3, (H2, 1), jnp.float32) / jnp.sqrt(H2)
    b3 = jnp.zeros((1, 1), jnp.float32)
    return (w1, b1, w2, b2, w3, b3)


def pair_property_ref(msij, params):
    w1, b1, w2, b2, w3, b3 = params
    hp = jax.lax.Precision.HIGHEST
    h = _ssp(jnp.matmul(msij, w1, precision=hp) + b1.reshape(-1))
    h = _ssp(jnp.matmul(h, w2, precision=hp) + b2.reshape(-1))
    return jnp.matmul(h, w3, precision=hp) + b3.reshape(-1)


if __name__ == "__main__":
    key = jax.random.PRNGKey(0)
    kx, kp, kx2 = jax.random.split(key, 3)

    # Small shape: B*A*NBR = 128 pair rows, F = 32.
    B, A, NBR = 2, 8, 8
    msij = jax.random.normal(kx, (B, A, NBR, F_IN), jnp.float32)
    params = init_params(kp)
    ref = pair_property_ref(msij, params)

    # f32 path (v5e-friendly default).
    out = jax.block_until_ready(pair_property(msij, params))
    assert out.shape == (B, A, NBR, 1)
    assert jnp.allclose(out, ref, atol=1e-4, rtol=1e-4)

    # bf16-MXU path (v6e/v7x): f32 accumulation + f32 ssp; loose sanity check.
    out_bf16 = jax.block_until_ready(
        pair_property(msij.astype(jnp.bfloat16), params,
                      mxu_dtype=jnp.bfloat16))
    assert out_bf16.shape == (B, A, NBR, 1)
    assert jnp.allclose(out_bf16, ref, atol=2.5e-1, rtol=2.5e-1)

    # Large-tile + ragged-M path: tm = 1024, grid = 2, no wrapper pad.
    B2, A2, NBR2 = 2, 8, 80          # M = 1280 -> one full + one partial block
    msij2 = jax.random.normal(kx2, (B2, A2, NBR2, F_IN), jnp.float32)
    ref2 = pair_property_ref(msij2, params)
    out2 = jax.block_until_ready(pair_property(msij2, params))
    assert out2.shape == (B2, A2, NBR2, 1)
    assert jnp.allclose(out2, ref2, atol=1e-4, rtol=1e-4)

    print("KERNEL_OK")
</pallas_src>

<mosaic_0001>
module attributes {stable_mosaic.version = 11 : i64} {
  func.func @_pair_property_kernel(%arg0: i32, %arg1: memref<128x32xf32, #tpu.memory_space<vmem>>, %arg2: memref<32x128xf32, #tpu.memory_space<vmem>>, %arg3: memref<1x128xf32, #tpu.memory_space<vmem>>, %arg4: memref<128x64xf32, #tpu.memory_space<vmem>>, %arg5: memref<1x64xf32, #tpu.memory_space<vmem>>, %arg6: memref<1x64xf32, #tpu.memory_space<vmem>>, %arg7: memref<1x128xf32, #tpu.memory_space<vmem>>) attributes {dimension_semantics = [#tpu.dimension_semantics<parallel>], iteration_bounds = array<i64: 1>, scalar_prefetch = 0 : i64, scratch_operands = 0 : i64, tpu.core_type = #tpu.core_type<tc>, window_params = [{transform_indices = @transform_0, window_bounds = array<i64: 128, 32>}, {pipeline_mode = #tpu.pipeline_mode<synchronous>, transform_indices = @transform_1, window_bounds = array<i64: 32, 128>}, {pipeline_mode = #tpu.pipeline_mode<synchronous>, transform_indices = @transform_2, window_bounds = array<i64: 1, 128>}, {pipeline_mode = #tpu.pipeline_mode<synchronous>, transform_indices = @transform_3, window_bounds = array<i64: 128, 64>}, {pipeline_mode = #tpu.pipeline_mode<synchronous>, transform_indices = @transform_4, window_bounds = array<i64: 1, 64>}, {pipeline_mode = #tpu.pipeline_mode<synchronous>, transform_indices = @transform_5, window_bounds = array<i64: 1, 64>}, {transform_indices = @transform_6, window_bounds = array<i64: 1, 128>}]} {
    %c0 = arith.constant 0 : index
    %c0_0 = arith.constant 0 : index
    %0 = vector.load %arg1[%c0, %c0_0] : memref<128x32xf32, #tpu.memory_space<vmem>>, vector<128x32xf32>
    %c0_1 = arith.constant 0 : index
    %c0_2 = arith.constant 0 : index
    %1 = vector.load %arg2[%c0_1, %c0_2] : memref<32x128xf32, #tpu.memory_space<vmem>>, vector<32x128xf32>
    %cst = arith.constant dense<0.000000e+00> : vector<128x128xf32>
    %2 = tpu.matmul %0, %1, %cst {dimension_numbers = #tpu.dot_dimension_numbers<[1], [0], [0], [1], [0, 0, 1, 1], [], []>} : vector<128x32xf32>, vector<32x128xf32>, vector<128x128xf32> -> vector<128x128xf32>
    %c0_3 = arith.constant 0 : index
    %c0_4 = arith.constant 0 : index
    %3 = vector.load %arg3[%c0_3, %c0_4] : memref<1x128xf32, #tpu.memory_space<vmem>>, vector<1x128xf32>
    %4 = vector.broadcast %3 : vector<1x128xf32> to vector<128x128xf32>
    %5 = arith.addf %2, %4 : vector<128x128xf32>
    %cst_5 = arith.constant 0.000000e+00 : f32
    %6 = vector.broadcast %cst_5 : f32 to vector<128x128xf32>
    %7 = arith.maximumf %5, %6 : vector<128x128xf32>
    %8 = math.absf %5 : vector<128x128xf32>
    %cst_6 = arith.constant 0.000000e+00 : f32
    %9 = vector.broadcast %cst_6 : f32 to vector<128x128xf32>
    %10 = arith.subf %9, %8 : vector<128x128xf32>
    %11 = math.exp %10 : vector<128x128xf32>
    %12 = math.log1p %11 : vector<128x128xf32>
    %13 = arith.addf %7, %12 : vector<128x128xf32>
    %cst_7 = arith.constant 0.693147182 : f32
    %14 = vector.broadcast %cst_7 : f32 to vector<128x128xf32>
    %15 = arith.subf %13, %14 : vector<128x128xf32>
    %c0_8 = arith.constant 0 : index
    %c0_9 = arith.constant 0 : index
    %16 = vector.load %arg4[%c0_8, %c0_9] : memref<128x64xf32, #tpu.memory_space<vmem>>, vector<128x64xf32>
    %cst_10 = arith.constant dense<0.000000e+00> : vector<128x64xf32>
    %17 = tpu.matmul %15, %16, %cst_10 {dimension_numbers = #tpu.dot_dimension_numbers<[1], [0], [0], [1], [0, 0, 1, 1], [], []>} : vector<128x128xf32>, vector<128x64xf32>, vector<128x64xf32> -> vector<128x64xf32>
    %c0_11 = arith.constant 0 : index
    %c0_12 = arith.constant 0 : index
    %18 = vector.load %arg5[%c0_11, %c0_12] : memref<1x64xf32, #tpu.memory_space<vmem>>, vector<1x64xf32>
    %19 = vector.broadcast %18 : vector<1x64xf32> to vector<128x64xf32>
    %20 = arith.addf %17, %19 : vector<128x64xf32>
    %cst_13 = arith.constant 0.000000e+00 : f32
    %21 = vector.broadcast %cst_13 : f32 to vector<128x64xf32>
    %22 = arith.maximumf %20, %21 : vector<128x64xf32>
    %23 = math.absf %20 : vector<128x64xf32>
    %cst_14 = arith.constant 0.000000e+00 : f32
    %24 = vector.broadcast %cst_14 : f32 to vector<128x64xf32>
    %25 = arith.subf %24, %23 : vector<128x64xf32>
    %26 = math.exp %25 : vector<128x64xf32>
    %27 = math.log1p %26 : vector<128x64xf32>
    %28 = arith.addf %22, %27 : vector<128x64xf32>
    %cst_15 = arith.constant 0.693147182 : f32
    %29 = vector.broadcast %cst_15 : f32 to vector<128x64xf32>
    %30 = arith.subf %28, %29 : vector<128x64xf32>
    %31 = vector.shape_cast %30 : vector<128x64xf32> to vector<1x128x64xf32>
    %c0_16 = arith.constant 0 : index
    %c0_17 = arith.constant 0 : index
    %32 = vector.load %arg6[%c0_16, %c0_17] : memref<1x64xf32, #tpu.memory_space<vmem>>, vector<1x64xf32>
    %33 = vector.shape_cast %32 : vector<1x64xf32> to vector<1x1x64xf32>
    %34 = vector.broadcast %33 : vector<1x1x64xf32> to vector<1x128x64xf32>
    %35 = arith.mulf %31, %34 : vector<1x128x64xf32>
    %cst_18 = arith.constant dense<0.000000e+00> : vector<1x128xf32>
    %36 = vector.multi_reduction <add>, %35, %cst_18 [2] : vector<1x128x64xf32> to vector<1x128xf32>
    %c0_19 = arith.constant 0 : index
    %c0_20 = arith.constant 0 : index
    %37 = vector.load %arg7[%c0_19, %c0_20] : memref<1x128xf32, #tpu.memory_space<vmem>>, vector<1x128xf32>
    tpu.vector_store %arg7[%c0_19, %c0_20], %36 {strides = array<i32>} : memref<1x128xf32, #tpu.memory_space<vmem>>, vector<1x128xf32>,
    return
  }
  func.func @transform_0(%arg0: i32) -> (i32, i32) {
    %c0_i32 = arith.constant 0 : i32
    %c0_i32_0 = arith.constant 0 : i32
    return %arg0, %c0_i32 : i32, i32
  }
  func.func @transform_1(%arg0: i32) -> (i32, i32) {
    %c0_i32 = arith.constant 0 : i32
    %c0_i32_0 = arith.constant 0 : i32
    %c0_i32_1 = arith.constant 0 : i32
    return %c0_i32, %c0_i32_0 : i32, i32
  }
  func.func @transform_2(%arg0: i32) -> (i32, i32) {
    %c0_i32 = arith.constant 0 : i32
    %c0_i32_0 = arith.constant 0 : i32
    %c0_i32_1 = arith.constant 0 : i32
    return %c0_i32, %c0_i32_0 : i32, i32
  }
  func.func @transform_3(%arg0: i32) -> (i32, i32) {
    %c0_i32 = arith.constant 0 : i32
    %c0_i32_0 = arith.constant 0 : i32
    %c0_i32_1 = arith.constant 0 : i32
    return %c0_i32, %c0_i32_0 : i32, i32
  }
  func.func @transform_4(%arg0: i32) -> (i32, i32) {
    %c0_i32 = arith.constant 0 : i32
    %c0_i32_0 = arith.constant 0 : i32
    %c0_i32_1 = arith.constant 0 : i32
    return %c0_i32, %c0_i32_0 : i32, i32
  }
  func.func @transform_5(%arg0: i32) -> (i32, i32) {
    %c0_i32 = arith.constant 0 : i32
    %c0_i32_0 = arith.constant 0 : i32
    %c0_i32_1 = arith.constant 0 : i32
    return %c0_i32, %c0_i32_0 : i32, i32
  }
  func.func @transform_6(%arg0: i32) -> (i32, i32) {
    %c0_i32 = arith.constant 0 : i32
    %c0_i32_0 = arith.constant 0 : i32
    return %arg0, %c0_i32 : i32, i32
  }
}

</mosaic_0001>

<llo_original>
// kernel: tpu_custom_call.1
$region0: #{tpu_custom_call.1}
  #allocation0 [shape = 'u32[]', space=smem, size = 0x4, offset = 0x4, fixed_abs, tag = 'smem constant byte address 0x4 - core index']
  #allocation1 [shape = 'u32[144,128]{1,0:T(1,128)}', space=vmem, size = 0x12000, scoped, tag = 'internal scratch']
  %s0 = inlined_call_operand.vmem [shape: f32[128,32], index: 0, kind: input, shape index: {}]
  %s1 = inlined_call_operand.vmem [shape: f32[32,128], index: 1, kind: input, shape index: {}]
  %s2 = inlined_call_operand.vmem [shape: f32[1,128], index: 2, kind: input, shape index: {}]
  %s3 = inlined_call_operand.vmem [shape: f32[128,64], index: 3, kind: input, shape index: {}]
  %s4 = inlined_call_operand.vmem [shape: f32[1,64], index: 4, kind: input, shape index: {}]
  %s5 = inlined_call_operand.vmem [shape: f32[1,64], index: 5, kind: input, shape index: {}]
  %s6 = inlined_call_operand.hbm [shape: f32[1,128], index: 6, kind: output, shape index: {}]
  %s7 = sld [smem:[#allocation0]]
  $region34: #{tpu_custom_call.1} parent=0
    _
  %s9 = ssub.s32 1, %s7
  %s10 = scalar_select 0, %s9, %s7
  $region1: #{tpu_custom_call.1} parent=0
    #allocation2 [shape = 'u8[512]{0}', space=vmem, size = 0x400, scoped, tag = 'output window, operand 0, single buffered']
    #allocation3 [shape = 's32[1]{0}', space=sflag, size = 0x4, scoped, tag = 'scoped memory for tpu_custom_call.1']
    %11 = vsyncpa [#allocation3], 0
    // Predicated region
    $region2: #{tpu_custom_call.1} parent=1 // pred_check
      _
    $region3: #{tpu_custom_call.1} parent=1 // pred_check_branch
      %13 = sbr.rel (0) target = $region5
    $region4: #{tpu_custom_call.1} parent=1 // pred_region
      _
    $region5: #{tpu_custom_call.1} parent=1 // pred_fallthru
      _
    // Predicated region
    $region6: #{tpu_custom_call.1} parent=1 // pred_check
      _
    $region7: #{tpu_custom_call.1} parent=1 // pred_check_branch
      %15 = sbr.rel (0) target = $region9
    $region8: #{tpu_custom_call.1} parent=1 // pred_region
      _
    $region9: #{tpu_custom_call.1} parent=1 // pred_fallthru
      _
    // Predicated region
    $region10: #{tpu_custom_call.1} parent=1 // pred_check
      _
    $region11: #{tpu_custom_call.1} parent=1 // pred_check_branch
      %17 = sbr.rel (0) target = $region13
    $region12: #{tpu_custom_call.1} parent=1 // pred_region
      _
    $region13: #{tpu_custom_call.1} parent=1 // pred_fallthru
      _
    // Predicated region
    $region14: #{tpu_custom_call.1} parent=1 // pred_check
      _
    $region15: #{tpu_custom_call.1} parent=1 // pred_check_branch
      %19 = sbr.rel (0) target = $region17
    $region16: #{tpu_custom_call.1} parent=1 // pred_region
      _
    $region17: #{tpu_custom_call.1} parent=1 // pred_fallthru
      _
    // Predicated region
    $region18: #{tpu_custom_call.1} parent=1 // pred_check
      _
    $region19: #{tpu_custom_call.1} parent=1 // pred_check_branch
      %21 = sbr.rel (0) target = $region21
    $region20: #{tpu_custom_call.1} parent=1 // pred_region
      _
    $region21: #{tpu_custom_call.1} parent=1 // pred_fallthru
      _
    // Predicated region
    $region22: #{tpu_custom_call.1} parent=1 // pred_check
      _
    $region23: #{tpu_custom_call.1} parent=1 // pred_check_branch
      %23 = sbr.rel (0) target = $region25
    $region24: #{tpu_custom_call.1} parent=1 // pred_region
      _
    $region25: #{tpu_custom_call.1} parent=1 // pred_fallthru
      _
    %v24 = vld [vmem:[%s0] sm:$0xff]
    %v25 = vld [vmem:[%s0 + $0x8] sm:$0xff]
    %v26 = vld [vmem:[%s0 + $0x10] sm:$0xff]
    %v27 = vld [vmem:[%s0 + $0x18] sm:$0xff]
    %v28 = vld [vmem:[%s0 + $0x20] sm:$0xff]
    %v29 = vld [vmem:[%s0 + $0x28] sm:$0xff]
    %v30 = vld [vmem:[%s0 + $0x30] sm:$0xff]
    %v31 = vld [vmem:[%s0 + $0x38] sm:$0xff]
    %v32 = vld [vmem:[%s0 + $0x40] sm:$0xff]
    %v33 = vld [vmem:[%s0 + $0x48] sm:$0xff]
    %v34 = vld [vmem:[%s0 + $0x50] sm:$0xff]
    %v35 = vld [vmem:[%s0 + $0x58] sm:$0xff]
    %v36 = vld [vmem:[%s0 + $0x60] sm:$0xff]
    %v37 = vld [vmem:[%s0 + $0x68] sm:$0xff]
    %v38 = vld [vmem:[%s0 + $0x70] sm:$0xff]
    %v39 = vld [vmem:[%s0 + $0x78] sm:$0xff]
    %v40 = vld [vmem:[%s1] sm:$0xff]
    %v41 = vld [vmem:[%s1 + $0x8] sm:$0xff]
    %v42 = vld [vmem:[%s1 + $0x10] sm:$0xff]
    %v43 = vld [vmem:[%s1 + $0x18] sm:$0xff]
    %v44 = vld [vmem:[%s2] sm:$0x1]
    %v46 = vlaneseq
    %v47 = vshrl.u32 %v46, 7
    %v48 = vsub.s32 0, %v47
    %v49 = vrot.slane %v44, %v48
    %vm51 = vcmask 261120
    %v53 = vsel %vm51, %v24, 0
    %v56 = vsel %vm51, %v25, 0
    %v59 = vsel %vm51, %v26, 0
    %v62 = vsel %vm51, %v27, 0
    %v65 = vsel %vm51, %v28, 0
    %v68 = vsel %vm51, %v29, 0
    %v71 = vsel %vm51, %v30, 0
    %v74 = vsel %vm51, %v31, 0
    %v77 = vsel %vm51, %v32, 0
    %v80 = vsel %vm51, %v33, 0
    %v83 = vsel %vm51, %v34, 0
    %v86 = vsel %vm51, %v35, 0
    %v89 = vsel %vm51, %v36, 0
    %v92 = vsel %vm51, %v37, 0
    %v95 = vsel %vm51, %v38, 0
    %v98 = vsel %vm51, %v39, 0
    %100 = vmatprep.subr.mxu0 0.0
    %101 = vmatpush1.msra.mxu0 %v40
    %102 = vmatprep.subr.mxu0 0.0
    %103 = vmatpush1.msra.mxu0 %v41
    %104 = vmatprep.subr.mxu0 0.0
    %105 = vmatpush1.msra.mxu0 %v42
    %106 = vmatprep.subr.mxu0 0.0
    %107 = vmatpush1.msra.mxu0 %v43
    %108 = vmatprep.subr.mxu0 0.0
    %109 = vmatpush1.msra.mxu0 0.0
    %110 = vmatprep.subr.mxu0 0.0
    %111 = vmatpush1.msra.mxu0 0.0
    %112 = vmatprep.subr.mxu0 0.0
    %113 = vmatpush1.msra.mxu0 0.0
    %114 = vmatprep.subr.mxu0 0.0
    %115 = vmatpush1.msra.mxu0 0.0
    %116 = vmatprep.subr.mxu0 0.0
    %117 = vmatpush1.msra.mxu0 0.0
    %118 = vmatprep.subr.mxu0 0.0
    %119 = vmatpush1.msra.mxu0 0.0
    %120 = vmatprep.subr.mxu0 0.0
    %121 = vmatpush1.msra.mxu0 0.0
    %122 = vmatprep.subr.mxu0 0.0
    %123 = vmatpush1.msra.mxu0 0.0
    %124 = vmatprep.subr.mxu0 0.0
    %125 = vmatpush1.msra.mxu0 0.0
    %126 = vmatprep.subr.mxu0 0.0
    %127 = vmatpush1.msra.mxu0 0.0
    %128 = vmatprep.subr.mxu0 0.0
    %129 = vmatpush1.msra.mxu0 0.0
    %130 = vmatprep.subr.mxu0 0.0
    %131 = vmatpush1.msra.mxu0 0.0
    %132 = vmatprep.subr.mxu0 0.0
    %133 = vmatpush1.msra.mxu0 0.0
    %134 = vmatprep.subr.mxu0 0.0
    %135 = vmatpush1.msra.mxu0 0.0
    %136 = vmatprep.subr.mxu0 0.0
    %137 = vmatpush1.msra.mxu0 0.0
    %138 = vmatprep.subr.mxu0 0.0
    %139 = vmatpush1.msra.mxu0 0.0
    %140 = vmatprep.subr.mxu0 0.0
    %141 = vmatpush1.msra.mxu0 0.0
    %142 = vmatprep.subr.mxu0 0.0
    %143 = vmatpush1.msra.mxu0 0.0
    %144 = vmatprep.subr.mxu0 0.0
    %145 = vmatpush1.msra.mxu0 0.0
    %146 = vmatprep.subr.mxu0 0.0
    %147 = vmatpush1.msra.mxu0 0.0
    %148 = vmatprep.subr.mxu0 0.0
    %149 = vmatpush1.msra.mxu0 0.0
    %150 = vmatprep.subr.mxu0 0.0
    %151 = vmatpush1.msra.mxu0 0.0
    %152 = vmatprep.subr.mxu0 0.0
    %153 = vmatpush1.msra.mxu0 0.0
    %154 = vmatprep.subr.mxu0 0.0
    %155 = vmatpush1.msra.mxu0 0.0
    %156 = vmatprep.subr.mxu0 0.0
    %157 = vmatpush1.msra.mxu0 0.0
    %158 = vmatprep.subr.mxu0 0.0
    %159 = vmatpush1.msra.mxu0 0.0
    %160 = vmatprep.subr.mxu0 0.0
    %161 = vmatpush1.msra.mxu0 0.0
    %162 = vmatprep.subr.mxu0 0.0
    %163 = vmatpush1.msra.mxu0 0.0
    %164 = vmatprep.mubr.f32.mxu0 0.0
    %165 = vmatmul.mubr.f32.gmra.mrb[0].mxu0 %v53
    %v166 = vpop.f32.mrb[0].mxu0
    %v167 = vadd.f32 %v49, %v166
    %v168 = vpop.f32.mrb[0].mxu0
    %169 = vmatprep.mubr.f32.mxu0 0.0
    %170 = vmatmul.mubr.f32.gmra.mrb[0].mxu0 %v56
    %v171 = vpop.f32.mrb[0].mxu0
    %v172 = vadd.f32 %v49, %v171
    %v173 = vpop.f32.mrb[0].mxu0
    %174 = vmatprep.mubr.f32.mxu0 0.0
    %175 = vmatmul.mubr.f32.gmra.mrb[0].mxu0 %v59
    %v176 = vpop.f32.mrb[0].mxu0
    %v177 = vadd.f32 %v49, %v176
    %v178 = vpop.f32.mrb[0].mxu0
    %179 = vmatprep.mubr.f32.mxu0 0.0
    %180 = vmatmul.mubr.f32.gmra.mrb[0].mxu0 %v62
    %v181 = vpop.f32.mrb[0].mxu0
    %v182 = vadd.f32 %v49, %v181
    %v183 = vpop.f32.mrb[0].mxu0
    %184 = vmatprep.mubr.f32.mxu0 0.0
    %185 = vmatmul.mubr.f32.gmra.mrb[0].mxu0 %v65
    %v186 = vpop.f32.mrb[0].mxu0
    %v187 = vadd.f32 %v49, %v186
    %v188 = vpop.f32.mrb[0].mxu0
    %189 = vmatprep.mubr.f32.mxu0 0.0
    %190 = vmatmul.mubr.f32.gmra.mrb[0].mxu0 %v68
    %v191 = vpop.f32.mrb[0].mxu0
    %v192 = vadd.f32 %v49, %v191
    %v193 = vpop.f32.mrb[0].mxu0
    %194 = vmatprep.mubr.f32.mxu0 0.0
    %195 = vmatmul.mubr.f32.gmra.mrb[0].mxu0 %v71
    %v196 = vpop.f32.mrb[0].mxu0
    %v197 = vadd.f32 %v49, %v196
    %v198 = vpop.f32.mrb[0].mxu0
    %199 = vmatprep.mubr.f32.mxu0 0.0
    %200 = vmatmul.mubr.f32.gmra.mrb[0].mxu0 %v74
    %v201 = vpop.f32.mrb[0].mxu0
    %v202 = vadd.f32 %v49, %v201
    %v203 = vpop.f32.mrb[0].mxu0
    %204 = vmatprep.mubr.f32.mxu0 0.0
    %205 = vmatmul.mubr.f32.gmra.mrb[0].mxu0 %v77
    %v206 = vpop.f32.mrb[0].mxu0
    %v207 = vadd.f32 %v49, %v206
    %v208 = vpop.f32.mrb[0].mxu0
    %209 = vmatprep.mubr.f32.mxu0 0.0
    %210 = vmatmul.mubr.f32.gmra.mrb[0].mxu0 %v80
    %v211 = vpop.f32.mrb[0].mxu0
    %v212 = vadd.f32 %v49, %v211
    %v213 = vpop.f32.mrb[0].mxu0
    %214 = vmatprep.mubr.f32.mxu0 0.0
    %215 = vmatmul.mubr.f32.gmra.mrb[0].mxu0 %v83
    %v216 = vpop.f32.mrb[0].mxu0
    %v217 = vadd.f32 %v49, %v216
    %v218 = vpop.f32.mrb[0].mxu0
    %219 = vmatprep.mubr.f32.mxu0 0.0
    %220 = vmatmul.mubr.f32.gmra.mrb[0].mxu0 %v86
    %v221 = vpop.f32.mrb[0].mxu0
    %v222 = vadd.f32 %v49, %v221
    %v223 = vpop.f32.mrb[0].mxu0
    %224 = vmatprep.mubr.f32.mxu0 0.0
    %225 = vmatmul.mubr.f32.gmra.mrb[0].mxu0 %v89
    %v226 = vpop.f32.mrb[0].mxu0
    %v227 = vadd.f32 %v49, %v226
    %v228 = vpop.f32.mrb[0].mxu0
    %229 = vmatprep.mubr.f32.mxu0 0.0
    %230 = vmatmul.mubr.f32.gmra.mrb[0].mxu0 %v92
    %v231 = vpop.f32.mrb[0].mxu0
    %v232 = vadd.f32 %v49, %v231
    %v233 = vpop.f32.mrb[0].mxu0
    %234 = vmatprep.mubr.f32.mxu0 0.0
    %235 = vmatmul.mubr.f32.gmra.mrb[0].mxu0 %v95
    %v236 = vpop.f32.mrb[0].mxu0
    %v237 = vadd.f32 %v49, %v236
    %v238 = vpop.f32.mrb[0].mxu0
    %239 = vmatprep.mubr.f32.mxu0 0.0
    %240 = vmatmul.mubr.f32.gmra.mrb[0].mxu0 %v98
    %v241 = vpop.f32.mrb[0].mxu0
    %v242 = vadd.f32 %v49, %v241
    %v243 = vpop.f32.mrb[0].mxu0
    %244 = vdwg.mxu0
    %v245 = vmax.f32 %v167, 0.0
    %v246 = vmax.f32 %v172, 0.0
    %v247 = vmax.f32 %v177, 0.0
    %v248 = vmax.f32 %v182, 0.0
    %v249 = vmax.f32 %v187, 0.0
    %v250 = vmax.f32 %v192, 0.0
    %v251 = vmax.f32 %v197, 0.0
    %v252 = vmax.f32 %v202, 0.0
    %v253 = vmax.f32 %v207, 0.0
    %v254 = vmax.f32 %v212, 0.0
    %v255 = vmax.f32 %v217, 0.0
    %v256 = vmax.f32 %v222, 0.0
    %v257 = vmax.f32 %v227, 0.0
    %v258 = vmax.f32 %v232, 0.0
    %v259 = vmax.f32 %v237, 0.0
    %v260 = vmax.f32 %v242, 0.0
    %v261 = vand.u32 2147483647, %v167
    %v262 = vand.u32 2147483647, %v172
    %v263 = vand.u32 2147483647, %v177
    %v264 = vand.u32 2147483647, %v182
    %v265 = vand.u32 2147483647, %v187
    %v266 = vand.u32 2147483647, %v192
    %v267 = vand.u32 2147483647, %v197
    %v268 = vand.u32 2147483647, %v202
    %v269 = vand.u32 2147483647, %v207
    %v270 = vand.u32 2147483647, %v212
    %v271 = vand.u32 2147483647, %v217
    %v272 = vand.u32 2147483647, %v222
    %v273 = vand.u32 2147483647, %v227
    %v274 = vand.u32 2147483647, %v232
    %v275 = vand.u32 2147483647, %v237
    %v276 = vand.u32 2147483647, %v242
    %v277 = vsub.f32 0.0, %v261
    %v278 = vsub.f32 0.0, %v262
    %v279 = vsub.f32 0.0, %v263
    %v280 = vsub.f32 0.0, %v264
    %v281 = vsub.f32 0.0, %v265
    %v282 = vsub.f32 0.0, %v266
    %v283 = vsub.f32 0.0, %v267
    %v284 = vsub.f32 0.0, %v268
    %v285 = vsub.f32 0.0, %v269
    %v286 = vsub.f32 0.0, %v270
    %v287 = vsub.f32 0.0, %v271
    %v288 = vsub.f32 0.0, %v272
    %v289 = vsub.f32 0.0, %v273
    %v290 = vsub.f32 0.0, %v274
    %v291 = vsub.f32 0.0, %v275
    %v292 = vsub.f32 0.0, %v276
    %v293 = vmul.f32 %v277, 1.442695
    %v294 = vpow.pop %v293
    %v295 = vmul.f32 %v278, 1.442695
    %v296 = vpow.pop %v295
    %v297 = vmul.f32 %v279, 1.442695
    %v298 = vpow.pop %v297
    %v299 = vmul.f32 %v280, 1.442695
    %v300 = vpow.pop %v299
    %v301 = vmul.f32 %v281, 1.442695
    %v302 = vpow.pop %v301
    %v303 = vmul.f32 %v282, 1.442695
    %v304 = vpow.pop %v303
    %v305 = vmul.f32 %v283, 1.442695
    %v306 = vpow.pop %v305
    %v307 = vmul.f32 %v284, 1.442695
    %v308 = vpow.pop %v307
    %v309 = vmul.f32 %v285, 1.442695
    %v310 = vpow.pop %v309
    %v311 = vmul.f32 %v286, 1.442695
    %v312 = vpow.pop %v311
    %v313 = vmul.f32 %v287, 1.442695
    %v314 = vpow.pop %v313
    %v315 = vmul.f32 %v288, 1.442695
    %v316 = vpow.pop %v315
    %v317 = vmul.f32 %v289, 1.442695
    %v318 = vpow.pop %v317
    %v319 = vmul.f32 %v290, 1.442695
    %v320 = vpow.pop %v319
    %v321 = vmul.f32 %v291, 1.442695
    %v322 = vpow.pop %v321
    %v323 = vmul.f32 %v292, 1.442695
    %v324 = vpow.pop %v323
    %v325 = vadd.f32 %v294, 1.0
    %v326 = vlog2.pop %v325
    %v327 = vmul.f32 %v326, 0.6931472
    %v328 = vmul.f32 -0.5, %v294
    %v329 = vadd.f32 %v328, 1.0
    %v330 = vmul.f32 %v329, %v294
    %v331 = vand.u32 2147483647, %v294
    %vm332 = vcmp.lt.f32.partialorder %v331, 0.0004427343
    %v333 = vsel %vm332, %v330, %v327
    %v334 = vadd.f32 %v296, 1.0
    %v335 = vlog2.pop %v334
    %v336 = vmul.f32 %v335, 0.6931472
    %v337 = vmul.f32 -0.5, %v296
    %v338 = vadd.f32 %v337, 1.0
    %v339 = vmul.f32 %v338, %v296
    %v340 = vand.u32 2147483647, %v296
    %vm341 = vcmp.lt.f32.partialorder %v340, 0.0004427343
    %v342 = vsel %vm341, %v339, %v336
    %v343 = vadd.f32 %v298, 1.0
    %v344 = vlog2.pop %v343
    %v345 = vmul.f32 %v344, 0.6931472
    %v346 = vmul.f32 -0.5, %v298
    %v347 = vadd.f32 %v346, 1.0
    %v348 = vmul.f32 %v347, %v298
    %v349 = vand.u32 2147483647, %v298
    %vm350 = vcmp.lt.f32.partialorder %v349, 0.0004427343
    %v351 = vsel %vm350, %v348, %v345
    %v352 = vadd.f32 %v300, 1.0
    %v353 = vlog2.pop %v352
    %v354 = vmul.f32 %v353, 0.6931472
    %v355 = vmul.f32 -0.5, %v300
    %v356 = vadd.f32 %v355, 1.0
    %v357 = vmul.f32 %v356, %v300
    %v358 = vand.u32 2147483647, %v300
    %vm359 = vcmp.lt.f32.partialorder %v358, 0.0004427343
    %v360 = vsel %vm359, %v357, %v354
    %v361 = vadd.f32 %v302, 1.0
    %v362 = vlog2.pop %v361
    %v363 = vmul.f32 %v362, 0.6931472
    %v364 = vmul.f32 -0.5, %v302
    %v365 = vadd.f32 %v364, 1.0
    %v366 = vmul.f32 %v365, %v302
    %v367 = vand.u32 2147483647, %v302
    %vm368 = vcmp.lt.f32.partialorder %v367, 0.0004427343
    %v369 = vsel %vm368, %v366, %v363
    %v370 = vadd.f32 %v304, 1.0
    %v371 = vlog2.pop %v370
    %v372 = vmul.f32 %v371, 0.6931472
    %v373 = vmul.f32 -0.5, %v304
    %v374 = vadd.f32 %v373, 1.0
    %v375 = vmul.f32 %v374, %v304
    %v376 = vand.u32 2147483647, %v304
    %vm377 = vcmp.lt.f32.partialorder %v376, 0.0004427343
    %v378 = vsel %vm377, %v375, %v372
    %v379 = vadd.f32 %v306, 1.0
    %v380 = vlog2.pop %v379
    %v381 = vmul.f32 %v380, 0.6931472
    %v382 = vmul.f32 -0.5, %v306
    %v383 = vadd.f32 %v382, 1.0
    %v384 = vmul.f32 %v383, %v306
    %v385 = vand.u32 2147483647, %v306
    %vm386 = vcmp.lt.f32.partialorder %v385, 0.0004427343
    %v387 = vsel %vm386, %v384, %v381
    %v388 = vadd.f32 %v308, 1.0
    %v389 = vlog2.pop %v388
    %v390 = vmul.f32 %v389, 0.6931472
    %v391 = vmul.f32 -0.5, %v308
    %v392 = vadd.f32 %v391, 1.0
    %v393 = vmul.f32 %v392, %v308
    %v394 = vand.u32 2147483647, %v308
    %vm395 = vcmp.lt.f32.partialorder %v394, 0.0004427343
    %v396 = vsel %vm395, %v393, %v390
    %v397 = vadd.f32 %v310, 1.0
    %v398 = vlog2.pop %v397
    %v399 = vmul.f32 %v398, 0.6931472
    %v400 = vmul.f32 -0.5, %v310
    %v401 = vadd.f32 %v400, 1.0
    %v402 = vmul.f32 %v401, %v310
    %v403 = vand.u32 2147483647, %v310
    %vm404 = vcmp.lt.f32.partialorder %v403, 0.0004427343
    %v405 = vsel %vm404, %v402, %v399
    %v406 = vadd.f32 %v312, 1.0
    %v407 = vlog2.pop %v406
    %v408 = vmul.f32 %v407, 0.6931472
    %v409 = vmul.f32 -0.5, %v312
    %v410 = vadd.f32 %v409, 1.0
    %v411 = vmul.f32 %v410, %v312
    %v412 = vand.u32 2147483647, %v312
    %vm413 = vcmp.lt.f32.partialorder %v412, 0.0004427343
    %v414 = vsel %vm413, %v411, %v408
    %v415 = vadd.f32 %v314, 1.0
    %v416 = vlog2.pop %v415
    %v417 = vmul.f32 %v416, 0.6931472
    %v418 = vmul.f32 -0.5, %v314
    %v419 = vadd.f32 %v418, 1.0
    %v420 = vmul.f32 %v419, %v314
    %v421 = vand.u32 2147483647, %v314
    %vm422 = vcmp.lt.f32.partialorder %v421, 0.0004427343
    %v423 = vsel %vm422, %v420, %v417
    %v424 = vadd.f32 %v316, 1.0
    %v425 = vlog2.pop %v424
    %v426 = vmul.f32 %v425, 0.6931472
    %v427 = vmul.f32 -0.5, %v316
    %v428 = vadd.f32 %v427, 1.0
    %v429 = vmul.f32 %v428, %v316
    %v430 = vand.u32 2147483647, %v316
    %vm431 = vcmp.lt.f32.partialorder %v430, 0.0004427343
    %v432 = vsel %vm431, %v429, %v426
    %v433 = vadd.f32 %v318, 1.0
    %v434 = vlog2.pop %v433
    %v435 = vmul.f32 %v434, 0.6931472
    %v436 = vmul.f32 -0.5, %v318
    %v437 = vadd.f32 %v436, 1.0
    %v438 = vmul.f32 %v437, %v318
    %v439 = vand.u32 2147483647, %v318
    %vm440 = vcmp.lt.f32.partialorder %v439, 0.0004427343
    %v441 = vsel %vm440, %v438, %v435
    %v442 = vadd.f32 %v320, 1.0
    %v443 = vlog2.pop %v442
    %v444 = vmul.f32 %v443, 0.6931472
    %v445 = vmul.f32 -0.5, %v320
    %v446 = vadd.f32 %v445, 1.0
    %v447 = vmul.f32 %v446, %v320
    %v448 = vand.u32 2147483647, %v320
    %vm449 = vcmp.lt.f32.partialorder %v448, 0.0004427343
    %v450 = vsel %vm449, %v447, %v444
    %v451 = vadd.f32 %v322, 1.0
    %v452 = vlog2.pop %v451
    %v453 = vmul.f32 %v452, 0.6931472
    %v454 = vmul.f32 -0.5, %v322
    %v455 = vadd.f32 %v454, 1.0
    %v456 = vmul.f32 %v455, %v322
    %v457 = vand.u32 2147483647, %v322
    %vm458 = vcmp.lt.f32.partialorder %v457, 0.0004427343
    %v459 = vsel %vm458, %v456, %v453
    %v460 = vadd.f32 %v324, 1.0
    %v461 = vlog2.pop %v460
    %v462 = vmul.f32 %v461, 0.6931472
    %v463 = vmul.f32 -0.5, %v324
    %v464 = vadd.f32 %v463, 1.0
    %v465 = vmul.f32 %v464, %v324
    %v466 = vand.u32 2147483647, %v324
    %vm467 = vcmp.lt.f32.partialorder %v466, 0.0004427343
    %v468 = vsel %vm467, %v465, %v462
    %v469 = vadd.f32 %v245, %v333
    %v470 = vadd.f32 %v246, %v342
    %v471 = vadd.f32 %v247, %v351
    %v472 = vadd.f32 %v248, %v360
    %v473 = vadd.f32 %v249, %v369
    %v474 = vadd.f32 %v250, %v378
    %v475 = vadd.f32 %v251, %v387
    %v476 = vadd.f32 %v252, %v396
    %v477 = vadd.f32 %v253, %v405
    %v478 = vadd.f32 %v254, %v414
    %v479 = vadd.f32 %v255, %v423
    %v480 = vadd.f32 %v256, %v432
    %v481 = vadd.f32 %v257, %v441
    %v482 = vadd.f32 %v258, %v450
    %v483 = vadd.f32 %v259, %v459
    %v484 = vadd.f32 %v260, %v468
    %v485 = vsub.f32 %v469, 0.6931472
    %v486 = vsub.f32 %v470, 0.6931472
    %v487 = vsub.f32 %v471, 0.6931472
    %v488 = vsub.f32 %v472, 0.6931472
    %v489 = vsub.f32 %v473, 0.6931472
    %v490 = vsub.f32 %v474, 0.6931472
    %v491 = vsub.f32 %v475, 0.6931472
    %v492 = vsub.f32 %v476, 0.6931472
    %v493 = vsub.f32 %v477, 0.6931472
    %v494 = vsub.f32 %v478, 0.6931472
    %v495 = vsub.f32 %v479, 0.6931472
    %v496 = vsub.f32 %v480, 0.6931472
    %v497 = vsub.f32 %v481, 0.6931472
    %v498 = vsub.f32 %v482, 0.6931472
    %v499 = vsub.f32 %v483, 0.6931472
    %v500 = vsub.f32 %v484, 0.6931472
    %v501 = vld [vmem:[%s3] sm:$0xff]
    %v502 = vld [vmem:[%s3 + $0x8] sm:$0xff]
    %v503 = vld [vmem:[%s3 + $0x10] sm:$0xff]
    %v504 = vld [vmem:[%s3 + $0x18] sm:$0xff]
    %v505 = vld [vmem:[%s3 + $0x20] sm:$0xff]
    %v506 = vld [vmem:[%s3 + $0x28] sm:$0xff]
    %v507 = vld [vmem:[%s3 + $0x30] sm:$0xff]
    %v508 = vld [vmem:[%s3 + $0x38] sm:$0xff]
    %v509 = vld [vmem:[%s3 + $0x40] sm:$0xff]
    %v510 = vld [vmem:[%s3 + $0x48] sm:$0xff]
    %v511 = vld [vmem:[%s3 + $0x50] sm:$0xff]
    %v512 = vld [vmem:[%s3 + $0x58] sm:$0xff]
    %v513 = vld [vmem:[%s3 + $0x60] sm:$0xff]
    %v514 = vld [vmem:[%s3 + $0x68] sm:$0xff]
    %v515 = vld [vmem:[%s3 + $0x70] sm:$0xff]
    %v516 = vld [vmem:[%s3 + $0x78] sm:$0xff]
    %v517 = vld [vmem:[%s4] sm:$0x1]
    %v519 = vlaneseq
    %v520 = vshrl.u32 %v519, 7
    %v521 = vsub.s32 0, %v520
    %v522 = vrot.slane %v517, %v521
    %524 = vmatprep.subr.mxu0 0.0
    %525 = vmatpush1.msra.mxu0 %v501
    %526 = vmatprep.subr.mxu0 0.0
    %527 = vmatpush1.msra.mxu0 %v502
    %528 = vmatprep.subr.mxu0 0.0
    %529 = vmatpush1.msra.mxu0 %v503
    %530 = vmatprep.subr.mxu0 0.0
    %531 = vmatpush1.msra.mxu0 %v504
    %532 = vmatprep.subr.mxu0 0.0
    %533 = vmatpush1.msra.mxu0 %v505
    %534 = vmatprep.subr.mxu0 0.0
    %535 = vmatpush1.msra.mxu0 %v506
    %536 = vmatprep.subr.mxu0 0.0
    %537 = vmatpush1.msra.mxu0 %v507
    %538 = vmatprep.subr.mxu0 0.0
    %539 = vmatpush1.msra.mxu0 %v508
    %540 = vmatprep.subr.mxu0 0.0
    %541 = vmatpush1.msra.mxu0 %v509
    %542 = vmatprep.subr.mxu0 0.0
    %543 = vmatpush1.msra.mxu0 %v510
    %544 = vmatprep.subr.mxu0 0.0
    %545 = vmatpush1.msra.mxu0 %v511
    %546 = vmatprep.subr.mxu0 0.0
    %547 = vmatpush1.msra.mxu0 %v512
    %548 = vmatprep.subr.mxu0 0.0
    %549 = vmatpush1.msra.mxu0 %v513
    %550 = vmatprep.subr.mxu0 0.0
    %551 = vmatpush1.msra.mxu0 %v514
    %552 = vmatprep.subr.mxu0 0.0
    %553 = vmatpush1.msra.mxu0 %v515
    %554 = vmatprep.subr.mxu0 0.0
    %555 = vmatpush1.msra.mxu0 %v516
    %556 = vmatprep.subr.mxu0 0.0
    %557 = vmatpush1.msra.mxu0 0.0
    %558 = vmatprep.subr.mxu0 0.0
    %559 = vmatpush1.msra.mxu0 0.0
    %560 = vmatprep.subr.mxu0 0.0
    %561 = vmatpush1.msra.mxu0 0.0
    %562 = vmatprep.subr.mxu0 0.0
    %563 = vmatpush1.msra.mxu0 0.0
    %564 = vmatprep.subr.mxu0 0.0
    %565 = vmatpush1.msra.mxu0 0.0
    %566 = vmatprep.subr.mxu0 0.0
    %567 = vmatpush1.msra.mxu0 0.0
    %568 = vmatprep.subr.mxu0 0.0
    %569 = vmatpush1.msra.mxu0 0.0
    %570 = vmatprep.subr.mxu0 0.0
    %571 = vmatpush1.msra.mxu0 0.0
    %572 = vmatprep.subr.mxu0 0.0
    %573 = vmatpush1.msra.mxu0 0.0
    %574 = vmatprep.subr.mxu0 0.0
    %575 = vmatpush1.msra.mxu0 0.0
    %576 = vmatprep.subr.mxu0 0.0
    %577 = vmatpush1.msra.mxu0 0.0
    %578 = vmatprep.subr.mxu0 0.0
    %579 = vmatpush1.msra.mxu0 0.0
    %580 = vmatprep.subr.mxu0 0.0
    %581 = vmatpush1.msra.mxu0 0.0
    %582 = vmatprep.subr.mxu0 0.0
    %583 = vmatpush1.msra.mxu0 0.0
    %584 = vmatprep.subr.mxu0 0.0
    %585 = vmatpush1.msra.mxu0 0.0
    %586 = vmatprep.subr.mxu0 0.0
    %587 = vmatpush1.msra.mxu0 0.0
    %588 = vmatprep.mubr.f32.mxu0 0.0
    %589 = vmatmul.mubr.f32.gmra.mrb[0].mxu0 %v485
    %v590 = vpop.f32.mrb[0].mxu0
    %v591 = vadd.f32 %v522, %v590
    %v592 = vpop.f32.mrb[0].mxu0
    %593 = vmatprep.mubr.f32.mxu0 0.0
    %594 = vmatmul.mubr.f32.gmra.mrb[0].mxu0 %v486
    %v595 = vpop.f32.mrb[0].mxu0
    %v596 = vadd.f32 %v522, %v595
    %v597 = vpop.f32.mrb[0].mxu0
    %598 = vmatprep.mubr.f32.mxu0 0.0
    %599 = vmatmul.mubr.f32.gmra.mrb[0].mxu0 %v487
    %v600 = vpop.f32.mrb[0].mxu0
    %v601 = vadd.f32 %v522, %v600
    %v602 = vpop.f32.mrb[0].mxu0
    %603 = vmatprep.mubr.f32.mxu0 0.0
    %604 = vmatmul.mubr.f32.gmra.mrb[0].mxu0 %v488
    %v605 = vpop.f32.mrb[0].mxu0
    %v606 = vadd.f32 %v522, %v605
    %v607 = vpop.f32.mrb[0].mxu0
    %608 = vmatprep.mubr.f32.mxu0 0.0
    %609 = vmatmul.mubr.f32.gmra.mrb[0].mxu0 %v489
    %v610 = vpop.f32.mrb[0].mxu0
    %v611 = vadd.f32 %v522, %v610
    %v612 = vpop.f32.mrb[0].mxu0
    %613 = vmatprep.mubr.f32.mxu0 0.0
    %614 = vmatmul.mubr.f32.gmra.mrb[0].mxu0 %v490
    %v615 = vpop.f32.mrb[0].mxu0
    %v616 = vadd.f32 %v522, %v615
    %v617 = vpop.f32.mrb[0].mxu0
    %618 = vmatprep.mubr.f32.mxu0 0.0
    %619 = vmatmul.mubr.f32.gmra.mrb[0].mxu0 %v491
    %v620 = vpop.f32.mrb[0].mxu0
    %v621 = vadd.f32 %v522, %v620
    %v622 = vpop.f32.mrb[0].mxu0
    %623 = vmatprep.mubr.f32.mxu0 0.0
    %624 = vmatmul.mubr.f32.gmra.mrb[0].mxu0 %v492
    %v625 = vpop.f32.mrb[0].mxu0
    %v626 = vadd.f32 %v522, %v625
    %v627 = vpop.f32.mrb[0].mxu0
    %628 = vmatprep.mubr.f32.mxu0 0.0
    %629 = vmatmul.mubr.f32.gmra.mrb[0].mxu0 %v493
    %v630 = vpop.f32.mrb[0].mxu0
    %v631 = vadd.f32 %v522, %v630
    %v632 = vpop.f32.mrb[0].mxu0
    %633 = vmatprep.mubr.f32.mxu0 0.0
    %634 = vmatmul.mubr.f32.gmra.mrb[0].mxu0 %v494
    %v635 = vpop.f32.mrb[0].mxu0
    %v636 = vadd.f32 %v522, %v635
    %v637 = vpop.f32.mrb[0].mxu0
    %638 = vmatprep.mubr.f32.mxu0 0.0
    %639 = vmatmul.mubr.f32.gmra.mrb[0].mxu0 %v495
    %v640 = vpop.f32.mrb[0].mxu0
    %v641 = vadd.f32 %v522, %v640
    %v642 = vpop.f32.mrb[0].mxu0
    %643 = vmatprep.mubr.f32.mxu0 0.0
    %644 = vmatmul.mubr.f32.gmra.mrb[0].mxu0 %v496
    %v645 = vpop.f32.mrb[0].mxu0
    %v646 = vadd.f32 %v522, %v645
    %v647 = vpop.f32.mrb[0].mxu0
    %648 = vmatprep.mubr.f32.mxu0 0.0
    %649 = vmatmul.mubr.f32.gmra.mrb[0].mxu0 %v497
    %v650 = vpop.f32.mrb[0].mxu0
    %v651 = vadd.f32 %v522, %v650
    %v652 = vpop.f32.mrb[0].mxu0
    %653 = vmatprep.mubr.f32.mxu0 0.0
    %654 = vmatmul.mubr.f32.gmra.mrb[0].mxu0 %v498
    %v655 = vpop.f32.mrb[0].mxu0
    %v656 = vadd.f32 %v522, %v655
    %v657 = vpop.f32.mrb[0].mxu0
    %658 = vmatprep.mubr.f32.mxu0 0.0
    %659 = vmatmul.mubr.f32.gmra.mrb[0].mxu0 %v499
    %v660 = vpop.f32.mrb[0].mxu0
    %v661 = vadd.f32 %v522, %v660
    %v662 = vpop.f32.mrb[0].mxu0
    %663 = vmatprep.mubr.f32.mxu0 0.0
    %664 = vmatmul.mubr.f32.gmra.mrb[0].mxu0 %v500
    %v665 = vpop.f32.mrb[0].mxu0
    %v666 = vadd.f32 %v522, %v665
    %v667 = vpop.f32.mrb[0].mxu0
    %668 = vdwg.mxu0
    %v669 = vmax.f32 %v591, 0.0
    %v670 = vmax.f32 %v596, 0.0
    %v671 = vmax.f32 %v601, 0.0
    %v672 = vmax.f32 %v606, 0.0
    %v673 = vmax.f32 %v611, 0.0
    %v674 = vmax.f32 %v616, 0.0
    %v675 = vmax.f32 %v621, 0.0
    %v676 = vmax.f32 %v626, 0.0
    %v677 = vmax.f32 %v631, 0.0
    %v678 = vmax.f32 %v636, 0.0
    %v679 = vmax.f32 %v641, 0.0
    %v680 = vmax.f32 %v646, 0.0
    %v681 = vmax.f32 %v651, 0.0
    %v682 = vmax.f32 %v656, 0.0
    %v683 = vmax.f32 %v661, 0.0
    %v684 = vmax.f32 %v666, 0.0
    %v685 = vand.u32 2147483647, %v591
    %v686 = vand.u32 2147483647, %v596
    %v687 = vand.u32 2147483647, %v601
    %v688 = vand.u32 2147483647, %v606
    %v689 = vand.u32 2147483647, %v611
    %v690 = vand.u32 2147483647, %v616
    %v691 = vand.u32 2147483647, %v621
    %v692 = vand.u32 2147483647, %v626
    %v693 = vand.u32 2147483647, %v631
    %v694 = vand.u32 2147483647, %v636
    %v695 = vand.u32 2147483647, %v641
    %v696 = vand.u32 2147483647, %v646
    %v697 = vand.u32 2147483647, %v651
    %v698 = vand.u32 2147483647, %v656
    %v699 = vand.u32 2147483647, %v661
    %v700 = vand.u32 2147483647, %v666
    %v701 = vsub.f32 0.0, %v685
    %v702 = vsub.f32 0.0, %v686
    %v703 = vsub.f32 0.0, %v687
    %v704 = vsub.f32 0.0, %v688
    %v705 = vsub.f32 0.0, %v689
    %v706 = vsub.f32 0.0, %v690
    %v707 = vsub.f32 0.0, %v691
    %v708 = vsub.f32 0.0, %v692
    %v709 = vsub.f32 0.0, %v693
    %v710 = vsub.f32 0.0, %v694
    %v711 = vsub.f32 0.0, %v695
    %v712 = vsub.f32 0.0, %v696
    %v713 = vsub.f32 0.0, %v697
    %v714 = vsub.f32 0.0, %v698
    %v715 = vsub.f32 0.0, %v699
    %v716 = vsub.f32 0.0, %v700
    %v717 = vmul.f32 %v701, 1.442695
    %v718 = vpow.pop %v717
    %v719 = vmul.f32 %v702, 1.442695
    %v720 = vpow.pop %v719
    %v721 = vmul.f32 %v703, 1.442695
    %v722 = vpow.pop %v721
    %v723 = vmul.f32 %v704, 1.442695
    %v724 = vpow.pop %v723
    %v725 = vmul.f32 %v705, 1.442695
    %v726 = vpow.pop %v725
    %v727 = vmul.f32 %v706, 1.442695
    %v728 = vpow.pop %v727
    %v729 = vmul.f32 %v707, 1.442695
    %v730 = vpow.pop %v729
    %v731 = vmul.f32 %v708, 1.442695
    %v732 = vpow.pop %v731
    %v733 = vmul.f32 %v709, 1.442695
    %v734 = vpow.pop %v733
    %v735 = vmul.f32 %v710, 1.442695
    %v736 = vpow.pop %v735
    %v737 = vmul.f32 %v711, 1.442695
    %v738 = vpow.pop %v737
    %v739 = vmul.f32 %v712, 1.442695
    %v740 = vpow.pop %v739
    %v741 = vmul.f32 %v713, 1.442695
    %v742 = vpow.pop %v741
    %v743 = vmul.f32 %v714, 1.442695
    %v744 = vpow.pop %v743
    %v745 = vmul.f32 %v715, 1.442695
    %v746 = vpow.pop %v745
    %v747 = vmul.f32 %v716, 1.442695
    %v748 = vpow.pop %v747
    %v749 = vadd.f32 %v718, 1.0
    %v750 = vlog2.pop %v749
    %v751 = vmul.f32 %v750, 0.6931472
    %v752 = vmul.f32 -0.5, %v718
    %v753 = vadd.f32 %v752, 1.0
    %v754 = vmul.f32 %v753, %v718
    %v755 = vand.u32 2147483647, %v718
    %vm756 = vcmp.lt.f32.partialorder %v755, 0.0004427343
    %v757 = vsel %vm756, %v754, %v751
    %v758 = vadd.f32 %v720, 1.0
    %v759 = vlog2.pop %v758
    %v760 = vmul.f32 %v759, 0.6931472
    %v761 = vmul.f32 -0.5, %v720
    %v762 = vadd.f32 %v761, 1.0
    %v763 = vmul.f32 %v762, %v720
    %v764 = vand.u32 2147483647, %v720
    %vm765 = vcmp.lt.f32.partialorder %v764, 0.0004427343
    %v766 = vsel %vm765, %v763, %v760
    %v767 = vadd.f32 %v722, 1.0
    %v768 = vlog2.pop %v767
    %v769 = vmul.f32 %v768, 0.6931472
    %v770 = vmul.f32 -0.5, %v722
    %v771 = vadd.f32 %v770, 1.0
    %v772 = vmul.f32 %v771, %v722
    %v773 = vand.u32 2147483647, %v722
    %vm774 = vcmp.lt.f32.partialorder %v773, 0.0004427343
    %v775 = vsel %vm774, %v772, %v769
    %v776 = vadd.f32 %v724, 1.0
    %v777 = vlog2.pop %v776
    %v778 = vmul.f32 %v777, 0.6931472
    %v779 = vmul.f32 -0.5, %v724
    %v780 = vadd.f32 %v779, 1.0
    %v781 = vmul.f32 %v780, %v724
    %v782 = vand.u32 2147483647, %v724
    %vm783 = vcmp.lt.f32.partialorder %v782, 0.0004427343
    %v784 = vsel %vm783, %v781, %v778
    %v785 = vadd.f32 %v726, 1.0
    %v786 = vlog2.pop %v785
    %v787 = vmul.f32 %v786, 0.6931472
    %v788 = vmul.f32 -0.5, %v726
    %v789 = vadd.f32 %v788, 1.0
    %v790 = vmul.f32 %v789, %v726
    %v791 = vand.u32 2147483647, %v726
    %vm792 = vcmp.lt.f32.partialorder %v791, 0.0004427343
    %v793 = vsel %vm792, %v790, %v787
    %v794 = vadd.f32 %v728, 1.0
    %v795 = vlog2.pop %v794
    %v796 = vmul.f32 %v795, 0.6931472
    %v797 = vmul.f32 -0.5, %v728
    %v798 = vadd.f32 %v797, 1.0
    %v799 = vmul.f32 %v798, %v728
    %v800 = vand.u32 2147483647, %v728
    %vm801 = vcmp.lt.f32.partialorder %v800, 0.0004427343
    %v802 = vsel %vm801, %v799, %v796
    %v803 = vadd.f32 %v730, 1.0
    %v804 = vlog2.pop %v803
    %v805 = vmul.f32 %v804, 0.6931472
    %v806 = vmul.f32 -0.5, %v730
    %v807 = vadd.f32 %v806, 1.0
    %v808 = vmul.f32 %v807, %v730
    %v809 = vand.u32 2147483647, %v730
    %vm810 = vcmp.lt.f32.partialorder %v809, 0.0004427343
    %v811 = vsel %vm810, %v808, %v805
    %v812 = vadd.f32 %v732, 1.0
    %v813 = vlog2.pop %v812
    %v814 = vmul.f32 %v813, 0.6931472
    %v815 = vmul.f32 -0.5, %v732
    %v816 = vadd.f32 %v815, 1.0
    %v817 = vmul.f32 %v816, %v732
    %v818 = vand.u32 2147483647, %v732
    %vm819 = vcmp.lt.f32.partialorder %v818, 0.0004427343
    %v820 = vsel %vm819, %v817, %v814
    %v821 = vadd.f32 %v734, 1.0
    %v822 = vlog2.pop %v821
    %v823 = vmul.f32 %v822, 0.6931472
    %v824 = vmul.f32 -0.5, %v734
    %v825 = vadd.f32 %v824, 1.0
    %v826 = vmul.f32 %v825, %v734
    %v827 = vand.u32 2147483647, %v734
    %vm828 = vcmp.lt.f32.partialorder %v827, 0.0004427343
    %v829 = vsel %vm828, %v826, %v823
    %v830 = vadd.f32 %v736, 1.0
    %v831 = vlog2.pop %v830
    %v832 = vmul.f32 %v831, 0.6931472
    %v833 = vmul.f32 -0.5, %v736
    %v834 = vadd.f32 %v833, 1.0
    %v835 = vmul.f32 %v834, %v736
    %v836 = vand.u32 2147483647, %v736
    %vm837 = vcmp.lt.f32.partialorder %v836, 0.0004427343
    %v838 = vsel %vm837, %v835, %v832
    %v839 = vadd.f32 %v738, 1.0
    %v840 = vlog2.pop %v839
    %v841 = vmul.f32 %v840, 0.6931472
    %v842 = vmul.f32 -0.5, %v738
    %v843 = vadd.f32 %v842, 1.0
    %v844 = vmul.f32 %v843, %v738
    %v845 = vand.u32 2147483647, %v738
    %vm846 = vcmp.lt.f32.partialorder %v845, 0.0004427343
    %v847 = vsel %vm846, %v844, %v841
    %v848 = vadd.f32 %v740, 1.0
    %v849 = vlog2.pop %v848
    %v850 = vmul.f32 %v849, 0.6931472
    %v851 = vmul.f32 -0.5, %v740
    %v852 = vadd.f32 %v851, 1.0
    %v853 = vmul.f32 %v852, %v740
    %v854 = vand.u32 2147483647, %v740
    %vm855 = vcmp.lt.f32.partialorder %v854, 0.0004427343
    %v856 = vsel %vm855, %v853, %v850
    %v857 = vadd.f32 %v742, 1.0
    %v858 = vlog2.pop %v857
    %v859 = vmul.f32 %v858, 0.6931472
    %v860 = vmul.f32 -0.5, %v742
    %v861 = vadd.f32 %v860, 1.0
    %v862 = vmul.f32 %v861, %v742
    %v863 = vand.u32 2147483647, %v742
    %vm864 = vcmp.lt.f32.partialorder %v863, 0.0004427343
    %v865 = vsel %vm864, %v862, %v859
    %v866 = vadd.f32 %v744, 1.0
    %v867 = vlog2.pop %v866
    %v868 = vmul.f32 %v867, 0.6931472
    %v869 = vmul.f32 -0.5, %v744
    %v870 = vadd.f32 %v869, 1.0
    %v871 = vmul.f32 %v870, %v744
    %v872 = vand.u32 2147483647, %v744
    %vm873 = vcmp.lt.f32.partialorder %v872, 0.0004427343
    %v874 = vsel %vm873, %v871, %v868
    %v875 = vadd.f32 %v746, 1.0
    %v876 = vlog2.pop %v875
    %v877 = vmul.f32 %v876, 0.6931472
    %v878 = vmul.f32 -0.5, %v746
    %v879 = vadd.f32 %v878, 1.0
    %v880 = vmul.f32 %v879, %v746
    %v881 = vand.u32 2147483647, %v746
    %vm882 = vcmp.lt.f32.partialorder %v881, 0.0004427343
    %v883 = vsel %vm882, %v880, %v877
    %v884 = vadd.f32 %v748, 1.0
    %v885 = vlog2.pop %v884
    %v886 = vmul.f32 %v885, 0.6931472
    %v887 = vmul.f32 -0.5, %v748
    %v888 = vadd.f32 %v887, 1.0
    %v889 = vmul.f32 %v888, %v748
    %v890 = vand.u32 2147483647, %v748
    %vm891 = vcmp.lt.f32.partialorder %v890, 0.0004427343
    %v892 = vsel %vm891, %v889, %v886
    %v893 = vadd.f32 %v669, %v757
    %v894 = vadd.f32 %v670, %v766
    %v895 = vadd.f32 %v671, %v775
    %v896 = vadd.f32 %v672, %v784
    %v897 = vadd.f32 %v673, %v793
    %v898 = vadd.f32 %v674, %v802
    %v899 = vadd.f32 %v675, %v811
    %v900 = vadd.f32 %v676, %v820
    %v901 = vadd.f32 %v677, %v829
    %v902 = vadd.f32 %v678, %v838
    %v903 = vadd.f32 %v679, %v847
    %v904 = vadd.f32 %v680, %v856
    %v905 = vadd.f32 %v681, %v865
    %v906 = vadd.f32 %v682, %v874
    %v907 = vadd.f32 %v683, %v883
    %v908 = vadd.f32 %v684, %v892
    %v909 = vsub.f32 %v893, 0.6931472
    %v910 = vsub.f32 %v894, 0.6931472
    %v911 = vsub.f32 %v895, 0.6931472
    %v912 = vsub.f32 %v896, 0.6931472
    %v913 = vsub.f32 %v897, 0.6931472
    %v914 = vsub.f32 %v898, 0.6931472
    %v915 = vsub.f32 %v899, 0.6931472
    %v916 = vsub.f32 %v900, 0.6931472
    %v917 = vsub.f32 %v901, 0.6931472
    %v918 = vsub.f32 %v902, 0.6931472
    %v919 = vsub.f32 %v903, 0.6931472
    %v920 = vsub.f32 %v904, 0.6931472
    %v921 = vsub.f32 %v905, 0.6931472
    %v922 = vsub.f32 %v906, 0.6931472
    %v923 = vsub.f32 %v907, 0.6931472
    %v924 = vsub.f32 %v908, 0.6931472
    %v925 = vld [vmem:[%s5] sm:$0x1]
    %v927 = vlaneseq
    %v928 = vshrl.u32 %v927, 7
    %v929 = vsub.s32 0, %v928
    %v930 = vrot.slane %v925, %v929
    %v932 = vmul.f32 %v909, %v930
    %v933 = vmul.f32 %v910, %v930
    %v934 = vmul.f32 %v911, %v930
    %v935 = vmul.f32 %v912, %v930
    %v936 = vmul.f32 %v913, %v930
    %v937 = vmul.f32 %v914, %v930
    %v938 = vmul.f32 %v915, %v930
    %v939 = vmul.f32 %v916, %v930
    %v940 = vmul.f32 %v917, %v930
    %v941 = vmul.f32 %v918, %v930
    %v942 = vmul.f32 %v919, %v930
    %v943 = vmul.f32 %v920, %v930
    %v944 = vmul.f32 %v921, %v930
    %v945 = vmul.f32 %v922, %v930
    %v946 = vmul.f32 %v923, %v930
    %v947 = vmul.f32 %v924, %v930
    %vm948 = vcmask 523264
    %v949 = vsel %vm948, %v932, 0.0
    %950 = vadd.xlane.f32.xlu0 %v949
    %v951 = vpop.xlane.xlu0 %950
    %v952 = vsel %vm948, %v933, 0.0
    %953 = vadd.xlane.f32.xlu0 %v952
    %v954 = vpop.xlane.xlu0 %953
    %v955 = vsel %vm948, %v934, 0.0
    %956 = vadd.xlane.f32.xlu0 %v955
    %v957 = vpop.xlane.xlu0 %956
    %v958 = vsel %vm948, %v935, 0.0
    %959 = vadd.xlane.f32.xlu0 %v958
    %v960 = vpop.xlane.xlu0 %959
    %v961 = vsel %vm948, %v936, 0.0
    %962 = vadd.xlane.f32.xlu0 %v961
    %v963 = vpop.xlane.xlu0 %962
    %v964 = vsel %vm948, %v937, 0.0
    %965 = vadd.xlane.f32.xlu0 %v964
    %v966 = vpop.xlane.xlu0 %965
    %v967 = vsel %vm948, %v938, 0.0
    %968 = vadd.xlane.f32.xlu0 %v967
    %v969 = vpop.xlane.xlu0 %968
    %v970 = vsel %vm948, %v939, 0.0
    %971 = vadd.xlane.f32.xlu0 %v970
    %v972 = vpop.xlane.xlu0 %971
    %v973 = vsel %vm948, %v940, 0.0
    %974 = vadd.xlane.f32.xlu0 %v973
    %v975 = vpop.xlane.xlu0 %974
    %v976 = vsel %vm948, %v941, 0.0
    %977 = vadd.xlane.f32.xlu0 %v976
    %v978 = vpop.xlane.xlu0 %977
    %v979 = vsel %vm948, %v942, 0.0
    %980 = vadd.xlane.f32.xlu0 %v979
    %v981 = vpop.xlane.xlu0 %980
    %v982 = vsel %vm948, %v943, 0.0
    %983 = vadd.xlane.f32.xlu0 %v982
    %v984 = vpop.xlane.xlu0 %983
    %v985 = vsel %vm948, %v944, 0.0
    %986 = vadd.xlane.f32.xlu0 %v985
    %v987 = vpop.xlane.xlu0 %986
    %v988 = vsel %vm948, %v945, 0.0
    %989 = vadd.xlane.f32.xlu0 %v988
    %v990 = vpop.xlane.xlu0 %989
    %v991 = vsel %vm948, %v946, 0.0
    %992 = vadd.xlane.f32.xlu0 %v991
    %v993 = vpop.xlane.xlu0 %992
    %v994 = vsel %vm948, %v947, 0.0
    %995 = vadd.xlane.f32.xlu0 %v994
    %v996 = vpop.xlane.xlu0 %995
    %v1013 = vlaneseq
    %v1014 = vand.u32 %v1013, 127
    %v1015 = vlaneseq
    %v1016 = vshrl.u32 %v1015, 7
    %v1017 = vsub.s32 %v1014, %v1016
    %v1018 = vrot.slane %v951, %v1017
    %v1019 = vadd.s32 %v1014, 4294967288
    %v1020 = vlaneseq
    %v1021 = vshrl.u32 %v1020, 7
    %v1022 = vsub.s32 %v1019, %v1021
    %v1023 = vrot.slane %v954, %v1022
    %vm1024 = vcmask 130112
    %v1025 = vsel %vm1024, %v1023, %v1018
    %v1026 = vadd.s32 %v1014, 4294967280
    %v1027 = vlaneseq
    %v1028 = vshrl.u32 %v1027, 7
    %v1029 = vsub.s32 %v1026, %v1028
    %v1030 = vrot.slane %v957, %v1029
    %vm1031 = vcmask 195712
    %v1032 = vsel %vm1031, %v1030, %v1025
    %v1033 = vadd.s32 %v1014, 4294967272
    %v1034 = vlaneseq
    %v1035 = vshrl.u32 %v1034, 7
    %v1036 = vsub.s32 %v1033, %v1035
    %v1037 = vrot.slane %v960, %v1036
    %vm1038 = vcmask 261312
    %v1039 = vsel %vm1038, %v1037, %v1032
    %v1040 = vadd.s32 %v1014, 4294967264
    %v1041 = vlaneseq
    %v1042 = vshrl.u32 %v1041, 7
    %v1043 = vsub.s32 %v1040, %v1042
    %v1044 = vrot.slane %v963, %v1043
    %vm1045 = vcmask 326912
    %v1046 = vsel %vm1045, %v1044, %v1039
    %v1047 = vadd.s32 %v1014, 4294967256
    %v1048 = vlaneseq
    %v1049 = vshrl.u32 %v1048, 7
    %v1050 = vsub.s32 %v1047, %v1049
    %v1051 = vrot.slane %v966, %v1050
    %vm1052 = vcmask 392512
    %v1053 = vsel %vm1052, %v1051, %v1046
    %v1054 = vadd.s32 %v1014, 4294967248
    %v1055 = vlaneseq
    %v1056 = vshrl.u32 %v1055, 7
    %v1057 = vsub.s32 %v1054, %v1056
    %v1058 = vrot.slane %v969, %v1057
    %vm1059 = vcmask 458112
    %v1060 = vsel %vm1059, %v1058, %v1053
    %v1061 = vadd.s32 %v1014, 4294967240
    %v1062 = vlaneseq
    %v1063 = vshrl.u32 %v1062, 7
    %v1064 = vsub.s32 %v1061, %v1063
    %v1065 = vrot.slane %v972, %v1064
    %vm1066 = vcmask 523712
    %v1067 = vsel %vm1066, %v1065, %v1060
    %v1068 = vadd.s32 %v1014, 4294967232
    %v1069 = vlaneseq
    %v1070 = vshrl.u32 %v1069, 7
    %v1071 = vsub.s32 %v1068, %v1070
    %v1072 = vrot.slane %v975, %v1071
    %vm1073 = vcmask 589312
    %v1074 = vsel %vm1073, %v1072, %v1067
    %v1075 = vadd.s32 %v1014, 4294967224
    %v1076 = vlaneseq
    %v1077 = vshrl.u32 %v1076, 7
    %v1078 = vsub.s32 %v1075, %v1077
    %v1079 = vrot.slane %v978, %v1078
    %vm1080 = vcmask 654912
    %v1081 = vsel %vm1080, %v1079, %v1074
    %v1082 = vadd.s32 %v1014, 4294967216
    %v1083 = vlaneseq
    %v1084 = vshrl.u32 %v1083, 7
    %v1085 = vsub.s32 %v1082, %v1084
    %v1086 = vrot.slane %v981, %v1085
    %vm1087 = vcmask 720512
    %v1088 = vsel %vm1087, %v1086, %v1081
    %v1089 = vadd.s32 %v1014, 4294967208
    %v1090 = vlaneseq
    %v1091 = vshrl.u32 %v1090, 7
    %v1092 = vsub.s32 %v1089, %v1091
    %v1093 = vrot.slane %v984, %v1092
    %vm1094 = vcmask 786112
    %v1095 = vsel %vm1094, %v1093, %v1088
    %v1096 = vadd.s32 %v1014, 4294967200
    %v1097 = vlaneseq
    %v1098 = vshrl.u32 %v1097, 7
    %v1099 = vsub.s32 %v1096, %v1098
    %v1100 = vrot.slane %v987, %v1099
    %vm1101 = vcmask 851712
    %v1102 = vsel %vm1101, %v1100, %v1095
    %v1103 = vadd.s32 %v1014, 4294967192
    %v1104 = vlaneseq
    %v1105 = vshrl.u32 %v1104, 7
    %v1106 = vsub.s32 %v1103, %v1105
    %v1107 = vrot.slane %v990, %v1106
    %vm1108 = vcmask 917312
    %v1109 = vsel %vm1108, %v1107, %v1102
    %v1110 = vadd.s32 %v1014, 4294967184
    %v1111 = vlaneseq
    %v1112 = vshrl.u32 %v1111, 7
    %v1113 = vsub.s32 %v1110, %v1112
    %v1114 = vrot.slane %v993, %v1113
    %vm1115 = vcmask 982912
    %v1116 = vsel %vm1115, %v1114, %v1109
    %v1117 = vadd.s32 %v1014, 4294967176
    %v1118 = vlaneseq
    %v1119 = vshrl.u32 %v1118, 7
    %v1120 = vsub.s32 %v1117, %v1119
    %v1121 = vrot.slane %v996, %v1120
    %vm1122 = vcmask 1048512
    %v1123 = vsel %vm1122, %v1121, %v1116
    %1125 = vst [vmem:[#allocation2] sm:$0x1] %v1123
    // Predicated region
    $region26: #{tpu_custom_call.1} parent=1 // pred_check
      _
    $region27: #{tpu_custom_call.1} parent=1 // pred_check_branch
      %1127 = sbr.rel (0) target = $region29
    $region28: #{tpu_custom_call.1} parent=1 // pred_region
      %s1129 = ssub.s32 16, 16
      %1130 = vsyncadd [#allocation3], %s1129
      %s1132 = sshll.u32 [#allocation2], 4
      %s1133 = int_to_ptr.vmem [resolvable:$true] %s1132
      %1135 = dma.vmem_to_hbm [thread:$0]  %s1133, 16, %s6, [#allocation3]
    $region29: #{tpu_custom_call.1} parent=1 // pred_fallthru
      _
    // Predicated region
    $region30: #{tpu_custom_call.1} parent=1 // pred_check
      _
    $region31: #{tpu_custom_call.1} parent=1 // pred_check_branch
      %1137 = sbr.rel (0) target = $region33
    $region32: #{tpu_custom_call.1} parent=1 // pred_region
      %1138 = dma.done [#allocation3], 16
    $region33: #{tpu_custom_call.1} parent=1 // pred_fallthru
      _
    %1139 = vsyncpa [#allocation3], 1

</llo_original>
